<compile_context>
chip_gen: v7x
topology: tpu7x:2x2x1
jax: 0.10.0
libtpu: 0.0.40
codegen_flags: <defaults>
</compile_context>

<pallas_src>
import functools
import math

import jax
import jax.numpy as jnp
from jax.experimental import pallas as pl
from jax.experimental.pallas import tpu as pltpu

HID1, HID2 = 512, 256
LANE = 128
LOG_2PI = math.log(2.0 * math.pi)


def _round_up(n, m):
    return ((n + m - 1) // m) * m


def _softplus(x):
    # Matches torch.nn.functional.softplus (beta=1, threshold=20).
    return jnp.where(x > 20.0, x, jnp.log1p(jnp.exp(jnp.minimum(x, 20.0))))


def _actor_critic_kernel(sample_action, action_dim,
                         x_ref, w1_ref, b1_ref, w2_ref, b2_ref,
                         wh_ref, bh_ref, aux_ref, out_ref):
    """fc1->relu->fc2->relu->fused heads->Normal stats, all VMEM resident.

    aux_ref is `noise` on the sample path and the provided `action` on the
    evaluate path (static python bool -> two traces, no dead inputs).
    Output is one lane-dense slab: [action | log_prob | entropy | value | 0].
    """
    A = action_dim

    # Hidden layers: bf16 MXU operands, f32 accumulation, f32 elementwise.
    x = x_ref[...].astype(jnp.bfloat16)
    h1 = jnp.maximum(
        jnp.dot(x, w1_ref[...], preferred_element_type=jnp.float32)
        + b1_ref[...], 0.0)
    h2 = jnp.maximum(
        jnp.dot(h1.astype(jnp.bfloat16), w2_ref[...],
                preferred_element_type=jnp.float32)
        + b2_ref[...], 0.0)

    # Single fused head matmul: columns [mean | std | value | zero-pad].
    head = (jnp.dot(h2, wh_ref[...], preferred_element_type=jnp.float32)
            + bh_ref[...])

    mean = jnp.tanh(head[:, 0:A])
    std = _softplus(head[:, A:2 * A])
    value = head[:, 2 * A:2 * A + 1]

    log_std = jnp.log(std)
    if sample_action:
        noise = aux_ref[...]
        action = mean + std * noise
        # (action - mean) == std * noise exactly -> quadratic term is noise^2/2.
        logp = -0.5 * noise * noise - log_std - 0.5 * LOG_2PI
    else:
        action = aux_ref[...]
        diff = action - mean
        logp = -(diff * diff) / (2.0 * std * std) - log_std - 0.5 * LOG_2PI
    ent = 0.5 + 0.5 * LOG_2PI + log_std

    # One unmasked, lane-dense store instead of four masked partial stores.
    pad_w = out_ref.shape[1] - (3 * A + 1)
    pad = jnp.zeros((action.shape[0], pad_w), jnp.float32)
    out_ref[...] = jnp.concatenate([action, logp, ent, value, pad], axis=-1)


def init_params(key, state_size, action_dim):
    """Deterministic synthetic parameters (PyTorch-Linear-like uniform init).

    w1/w2 are stored as bfloat16 (MXU operands). The three heads are packed
    into one lane-padded f32 weight `wh` / bias `bh`:
        columns [0:A)       -> fc_actor_mean
        columns [A:2A)      -> fc_actor_std
        column  [2A]        -> fc_critic
        remaining columns   -> zero padding up to a multiple of 128 lanes
    """
    ks = jax.random.split(key, 10)

    def linear(kw, kb, fan_in, fan_out):
        bound = 1.0 / math.sqrt(fan_in)
        w = jax.random.uniform(kw, (fan_in, fan_out), jnp.float32, -bound, bound)
        b = jax.random.uniform(kb, (1, fan_out), jnp.float32, -bound, bound)
        return w, b

    A = action_dim
    head_w = _round_up(2 * A + 1, LANE)

    w1, b1 = linear(ks[0], ks[1], state_size, HID1)
    w2, b2 = linear(ks[2], ks[3], HID1, HID2)
    wm, bm = linear(ks[4], ks[5], HID2, A)
    ws, bs = linear(ks[6], ks[7], HID2, A)
    wv, bv = linear(ks[8], ks[9], HID2, 1)

    wh = jnp.zeros((HID2, head_w), jnp.float32)
    wh = wh.at[:, 0:A].set(wm).at[:, A:2 * A].set(ws).at[:, 2 * A:2 * A + 1].set(wv)
    bh = jnp.zeros((1, head_w), jnp.float32)
    bh = bh.at[:, 0:A].set(bm).at[:, A:2 * A].set(bs).at[:, 2 * A:2 * A + 1].set(bv)

    # note: the module's `self.std` nn.Parameter is unused in forward().
    return dict(w1=w1.astype(jnp.bfloat16), b1=b1,
                w2=w2.astype(jnp.bfloat16), b2=b2,
                wh=wh, bh=bh, action_dim=A)


def crawler_actor_critic(params, x, action=None, key=None):
    """Pallas implementation of CrawlerActorCritic.forward."""
    B = x.shape[0]
    A = params["action_dim"]
    state_size = x.shape[1]
    head_w = params["wh"].shape[1]
    out_w = _round_up(3 * A + 1, LANE)

    sample = action is None
    if sample:
        aux = jax.random.normal(key, (B, A), dtype=jnp.float32)   # noise
    else:
        aux = action.astype(jnp.float32)                          # given action

    ins = (x.astype(jnp.float32),
           params["w1"], params["b1"], params["w2"], params["b2"],
           params["wh"], params["bh"], aux)

    vmem = pl.BlockSpec(memory_space=pltpu.MemorySpace.VMEM)
    flops = 2 * B * (state_size * HID1 + HID1 * HID2 + HID2 * head_w)
    bytes_accessed = (sum(int(a.size) * a.dtype.itemsize for a in ins)
                      + B * out_w * 4)
    cost = pl.CostEstimate(flops=flops,
                           transcendentals=4 * B * A,
                           bytes_accessed=bytes_accessed)

    out = pl.pallas_call(
        functools.partial(_actor_critic_kernel, sample, A),
        out_shape=jax.ShapeDtypeStruct((B, out_w), jnp.float32),
        in_specs=[vmem] * len(ins),
        out_specs=vmem,
        cost_estimate=cost,
    )(*ins)

    action_out = out[:, 0:A]
    logp = out[:, A:2 * A]
    ent = out[:, 2 * A:3 * A]
    value = out[:, 3 * A:3 * A + 1]
    return action_out, logp, ent, value


def _reference(params, x, noise):
    """Pure-JAX reference of the same forward (same bf16 matmul precision)."""
    A = params["action_dim"]
    h1 = jax.nn.relu(
        jnp.dot(x.astype(jnp.bfloat16), params["w1"],
                preferred_element_type=jnp.float32) + params["b1"])
    h2 = jax.nn.relu(
        jnp.dot(h1.astype(jnp.bfloat16), params["w2"],
                preferred_element_type=jnp.float32) + params["b2"])
    head = (jnp.dot(h2, params["wh"], preferred_element_type=jnp.float32)
            + params["bh"])
    mean = jnp.tanh(head[:, 0:A])
    std = _softplus(head[:, A:2 * A])
    v = head[:, 2 * A:2 * A + 1]
    action = mean + std * noise
    logp = (-((action - mean) ** 2) / (2.0 * std * std)
            - jnp.log(std) - 0.5 * LOG_2PI)
    ent = 0.5 + 0.5 * LOG_2PI + jnp.log(std)
    return action, logp, ent, v


if __name__ == "__main__":
    STATE_SIZE = 32
    ACTION_DIM = 8
    BATCH = 8

    root = jax.random.PRNGKey(0)
    k_params, k_x, k_noise = jax.random.split(root, 3)

    params = init_params(k_params, STATE_SIZE, ACTION_DIM)
    x = jax.random.normal(k_x, (BATCH, STATE_SIZE), dtype=jnp.float32)

    # sample path (action=None)
    action, log_prob, entropy, value = crawler_actor_critic(
        params, x, action=None, key=k_noise)
    jax.block_until_ready((action, log_prob, entropy, value))

    # correctness vs. pure-JAX reference with the same noise
    noise = jax.random.normal(k_noise, (BATCH, ACTION_DIM), dtype=jnp.float32)
    ref = _reference(params, x, noise)
    for got, want in zip((action, log_prob, entropy, value), ref):
        assert jnp.allclose(got, want, atol=2e-3, rtol=2e-3), (got, want)

    # evaluate path (action provided)
    a2, lp2, ent2, v2 = crawler_actor_critic(params, x, action=action)
    jax.block_until_ready((a2, lp2, ent2, v2))
    assert jnp.allclose(a2, action)
    assert jnp.allclose(lp2, log_prob, atol=1e-3, rtol=1e-3)
    assert jnp.allclose(ent2, entropy, atol=1e-5)
    assert jnp.allclose(v2, value, atol=1e-5)

    print("KERNEL_OK")
</pallas_src>

<mosaic_0001>
module attributes {stable_mosaic.version = 11 : i64} {
  func.func @_actor_critic_kernel(%arg0: memref<8x32xf32, #tpu.memory_space<vmem>>, %arg1: memref<32x512xbf16, #tpu.memory_space<vmem>>, %arg2: memref<1x512xf32, #tpu.memory_space<vmem>>, %arg3: memref<512x256xbf16, #tpu.memory_space<vmem>>, %arg4: memref<1x256xf32, #tpu.memory_space<vmem>>, %arg5: memref<256x128xf32, #tpu.memory_space<vmem>>, %arg6: memref<1x128xf32, #tpu.memory_space<vmem>>, %arg7: memref<8x8xf32, #tpu.memory_space<vmem>>, %arg8: memref<8x128xf32, #tpu.memory_space<vmem>>) attributes {dimension_semantics = [], scalar_prefetch = 0 : i64, scratch_operands = 0 : i64, tpu.core_type = #tpu.core_type<tc>} {
    %c0 = arith.constant 0 : index
    %c0_0 = arith.constant 0 : index
    %0 = vector.load %arg0[%c0, %c0_0] : memref<8x32xf32, #tpu.memory_space<vmem>>, vector<8x32xf32>
    %1 = arith.truncf %0 : vector<8x32xf32> to vector<8x32xbf16>
    %c0_1 = arith.constant 0 : index
    %c0_2 = arith.constant 0 : index
    %2 = vector.load %arg1[%c0_1, %c0_2] : memref<32x512xbf16, #tpu.memory_space<vmem>>, vector<32x512xbf16>
    %cst = arith.constant dense<0.000000e+00> : vector<8x512xf32>
    %3 = tpu.matmul %1, %2, %cst {dimension_numbers = #tpu.dot_dimension_numbers<[1], [0], [0], [1], [0, 0, 1, 1], [], []>} : vector<8x32xbf16>, vector<32x512xbf16>, vector<8x512xf32> -> vector<8x512xf32>
    %c0_3 = arith.constant 0 : index
    %c0_4 = arith.constant 0 : index
    %4 = vector.load %arg2[%c0_3, %c0_4] : memref<1x512xf32, #tpu.memory_space<vmem>>, vector<1x512xf32>
    %5 = vector.broadcast %4 : vector<1x512xf32> to vector<8x512xf32>
    %6 = arith.addf %3, %5 : vector<8x512xf32>
    %cst_5 = arith.constant 0.000000e+00 : f32
    %7 = vector.broadcast %cst_5 : f32 to vector<8x512xf32>
    %8 = arith.maximumf %6, %7 : vector<8x512xf32>
    %9 = arith.truncf %8 : vector<8x512xf32> to vector<8x512xbf16>
    %c0_6 = arith.constant 0 : index
    %c0_7 = arith.constant 0 : index
    %10 = vector.load %arg3[%c0_6, %c0_7] : memref<512x256xbf16, #tpu.memory_space<vmem>>, vector<512x256xbf16>
    %cst_8 = arith.constant dense<0.000000e+00> : vector<8x256xf32>
    %11 = tpu.matmul %9, %10, %cst_8 {dimension_numbers = #tpu.dot_dimension_numbers<[1], [0], [0], [1], [0, 0, 1, 1], [], []>} : vector<8x512xbf16>, vector<512x256xbf16>, vector<8x256xf32> -> vector<8x256xf32>
    %c0_9 = arith.constant 0 : index
    %c0_10 = arith.constant 0 : index
    %12 = vector.load %arg4[%c0_9, %c0_10] : memref<1x256xf32, #tpu.memory_space<vmem>>, vector<1x256xf32>
    %13 = vector.broadcast %12 : vector<1x256xf32> to vector<8x256xf32>
    %14 = arith.addf %11, %13 : vector<8x256xf32>
    %cst_11 = arith.constant 0.000000e+00 : f32
    %15 = vector.broadcast %cst_11 : f32 to vector<8x256xf32>
    %16 = arith.maximumf %14, %15 : vector<8x256xf32>
    %c0_12 = arith.constant 0 : index
    %c0_13 = arith.constant 0 : index
    %17 = vector.load %arg5[%c0_12, %c0_13] : memref<256x128xf32, #tpu.memory_space<vmem>>, vector<256x128xf32>
    %cst_14 = arith.constant dense<0.000000e+00> : vector<8x128xf32>
    %18 = tpu.matmul %16, %17, %cst_14 {dimension_numbers = #tpu.dot_dimension_numbers<[1], [0], [0], [1], [0, 0, 1, 1], [], []>} : vector<8x256xf32>, vector<256x128xf32>, vector<8x128xf32> -> vector<8x128xf32>
    %c0_15 = arith.constant 0 : index
    %c0_16 = arith.constant 0 : index
    %19 = vector.load %arg6[%c0_15, %c0_16] : memref<1x128xf32, #tpu.memory_space<vmem>>, vector<1x128xf32>
    %20 = vector.broadcast %19 : vector<1x128xf32> to vector<8x128xf32>
    %21 = arith.addf %18, %20 : vector<8x128xf32>
    %22 = vector.extract_strided_slice %21 {offsets = [0, 0], sizes = [8, 8], strides = [1, 1]} : vector<8x128xf32> to vector<8x8xf32>
    %23 = math.tanh %22 : vector<8x8xf32>
    %24 = vector.extract_strided_slice %21 {offsets = [0, 8], sizes = [8, 8], strides = [1, 1]} : vector<8x128xf32> to vector<8x8xf32>
    %cst_17 = arith.constant 2.000000e+01 : f32
    %25 = vector.broadcast %cst_17 : f32 to vector<8x8xf32>
    %26 = arith.cmpf ogt, %24, %25 : vector<8x8xf32>
    %cst_18 = arith.constant 2.000000e+01 : f32
    %27 = vector.broadcast %cst_18 : f32 to vector<8x8xf32>
    %28 = arith.minimumf %24, %27 : vector<8x8xf32>
    %29 = math.exp %28 : vector<8x8xf32>
    %30 = math.log1p %29 : vector<8x8xf32>
    %31 = arith.select %26, %24, %30 : vector<8x8xi1>, vector<8x8xf32>
    %32 = vector.extract_strided_slice %21 {offsets = [0, 16], sizes = [8, 1], strides = [1, 1]} : vector<8x128xf32> to vector<8x1xf32>
    %33 = math.log %31 : vector<8x8xf32>
    %c0_19 = arith.constant 0 : index
    %c0_20 = arith.constant 0 : index
    %34 = vector.load %arg7[%c0_19, %c0_20] : memref<8x8xf32, #tpu.memory_space<vmem>>, vector<8x8xf32>
    %35 = arith.mulf %31, %34 : vector<8x8xf32>
    %36 = arith.addf %23, %35 : vector<8x8xf32>
    %cst_21 = arith.constant -5.000000e-01 : f32
    %37 = vector.broadcast %cst_21 : f32 to vector<8x8xf32>
    %38 = arith.mulf %37, %34 : vector<8x8xf32>
    %39 = arith.mulf %38, %34 : vector<8x8xf32>
    %40 = arith.subf %39, %33 : vector<8x8xf32>
    %cst_22 = arith.constant 0.918938517 : f32
    %41 = vector.broadcast %cst_22 : f32 to vector<8x8xf32>
    %42 = arith.subf %40, %41 : vector<8x8xf32>
    %cst_23 = arith.constant 1.41893852 : f32
    %43 = vector.broadcast %cst_23 : f32 to vector<8x8xf32>
    %44 = arith.addf %43, %33 : vector<8x8xf32>
    %cst_24 = arith.constant 0.000000e+00 : f32
    %45 = vector.broadcast %cst_24 : f32 to vector<8x103xf32>
    %46 = tpu.concatenate %36, %42, %44, %32, %45 in 1 : vector<8x8xf32>, vector<8x8xf32>, vector<8x8xf32>, vector<8x1xf32>, vector<8x103xf32> -> vector<8x128xf32>
    %c0_25 = arith.constant 0 : index
    %c0_26 = arith.constant 0 : index
    %47 = vector.load %arg8[%c0_25, %c0_26] : memref<8x128xf32, #tpu.memory_space<vmem>>, vector<8x128xf32>
    tpu.vector_store %arg8[%c0_25, %c0_26], %46 {strides = array<i32>} : memref<8x128xf32, #tpu.memory_space<vmem>>, vector<8x128xf32>,
    return
  }
}

</mosaic_0001>

<llo_original>
// kernel: tpu_custom_call.1
$region0: #{tpu_custom_call.1}
  #allocation0 [shape = 'u32[]', space=smem, size = 0x4, offset = 0x4, fixed_abs, tag = 'smem constant byte address 0x4 - core index']
  #allocation1 [shape = 'u32[144,128]{1,0:T(1,128)}', space=vmem, size = 0x12000, scoped, tag = 'internal scratch']
  %s0 = inlined_call_operand.hbm [shape: f32[8,32], index: 0, kind: input, shape index: {}]
  %s1 = inlined_call_operand.hbm [shape: bf16[32,512], index: 1, kind: input, shape index: {}]
  %s2 = inlined_call_operand.vmem [shape: f32[1,512], index: 2, kind: input, shape index: {}]
  %s3 = inlined_call_operand.hbm [shape: bf16[512,256], index: 3, kind: input, shape index: {}]
  %s4 = inlined_call_operand.vmem [shape: f32[1,256], index: 4, kind: input, shape index: {}]
  %s5 = inlined_call_operand.hbm [shape: f32[256,128], index: 5, kind: input, shape index: {}]
  %s6 = inlined_call_operand.vmem [shape: f32[1,128], index: 6, kind: input, shape index: {}]
  %s7 = inlined_call_operand.vmem [shape: f32[8,8], index: 7, kind: input, shape index: {}]
  %s8 = inlined_call_operand.hbm [shape: f32[8,128], index: 8, kind: output, shape index: {}]
  %s9 = sld [smem:[#allocation0]]
  $region58: #{tpu_custom_call.1} parent=0
    _
  %s11 = ssub.s32 1, %s9
  %s12 = scalar_select 0, %s11, %s9
  $region1: #{tpu_custom_call.1} parent=0
    #allocation2 [shape = 'u8[4096]{0}', space=vmem, size = 0x1000, scoped, tag = 'input window, operand 0, single buffered']
    #allocation3 [shape = 's32[1]{0}', space=sflag, size = 0x4, scoped, tag = 'scoped memory for tpu_custom_call.1']
    #allocation4 [shape = 's32[1]{0}', space=sflag, size = 0x4, scoped, tag = 'scoped memory for tpu_custom_call.1']
    #allocation5 [shape = 'u8[32768]{0}', space=vmem, size = 0x8000, scoped, tag = 'input window, operand 1, single buffered']
    #allocation6 [shape = 's32[1]{0}', space=sflag, size = 0x4, scoped, tag = 'scoped memory for tpu_custom_call.1']
    #allocation7 [shape = 'u8[262144]{0}', space=vmem, size = 0x40000, scoped, tag = 'input window, operand 3, single buffered']
    #allocation8 [shape = 'u8[131072]{0}', space=vmem, size = 0x20000, scoped, tag = 'input window, operand 5, single buffered']
    #allocation9 [shape = 's32[1]{0}', space=sflag, size = 0x4, scoped, tag = 'scoped memory for tpu_custom_call.1']
    #allocation10 [shape = 'u8[4096]{0}', space=vmem, size = 0x1000, scoped, tag = 'output window, operand 0, single buffered']
    %13 = vsyncpa [#allocation3], 0
    %14 = vsyncpa [#allocation6], 0
    %15 = vsyncpa [#allocation9], 0
    %16 = vsyncpa [#allocation4], 0
    // Predicated region
    $region2: #{tpu_custom_call.1} parent=1 // pred_check
      _
    $region3: #{tpu_custom_call.1} parent=1 // pred_check_branch
      %18 = sbr.rel (0) target = $region5
    $region4: #{tpu_custom_call.1} parent=1 // pred_region
      %s20 = ssub.s32 128, 128
      %21 = vsyncadd [#allocation3], %s20
      %s23 = sshll.u32 [#allocation2], 4
      %s24 = int_to_ptr.vmem [resolvable:$true] %s23
      %26 = dma.hbm_to_vmem [thread:$0]  %s0, 128, %s24, [#allocation3]
    $region5: #{tpu_custom_call.1} parent=1 // pred_fallthru
      _
    // Predicated region
    $region6: #{tpu_custom_call.1} parent=1 // pred_check
      _
    $region7: #{tpu_custom_call.1} parent=1 // pred_check_branch
      %28 = sbr.rel (0) target = $region9
    $region8: #{tpu_custom_call.1} parent=1 // pred_region
      %s30 = ssub.s32 1024, 1024
      %31 = vsyncadd [#allocation6], %s30
      %s32 = sshll.u32 [#allocation5], 4
      %s33 = int_to_ptr.vmem [resolvable:$true] %s32
      %38 = dma.hbm_to_vmem [thread:$0]  %s1, 1024, %s33, [#allocation6], 256, 256, 16
    $region9: #{tpu_custom_call.1} parent=1 // pred_fallthru
      _
    // Predicated region
    $region10: #{tpu_custom_call.1} parent=1 // pred_check
      _
    $region11: #{tpu_custom_call.1} parent=1 // pred_check_branch
      %40 = sbr.rel (0) target = $region13
    $region12: #{tpu_custom_call.1} parent=1 // pred_region
      _
    $region13: #{tpu_custom_call.1} parent=1 // pred_fallthru
      _
    // Predicated region
    $region14: #{tpu_custom_call.1} parent=1 // pred_check
      _
    $region15: #{tpu_custom_call.1} parent=1 // pred_check_branch
      %42 = sbr.rel (0) target = $region17
    $region16: #{tpu_custom_call.1} parent=1 // pred_region
      %s44 = ssub.s32 8192, 8192
      %45 = vsyncadd [#allocation6], %s44
      %s46 = sshll.u32 [#allocation7], 4
      %s47 = int_to_ptr.vmem [resolvable:$true] %s46
      %52 = dma.hbm_to_vmem [thread:$0]  %s3, 8192, %s47, [#allocation6], 128, 128, 8
    $region17: #{tpu_custom_call.1} parent=1 // pred_fallthru
      _
    // Predicated region
    $region18: #{tpu_custom_call.1} parent=1 // pred_check
      _
    $region19: #{tpu_custom_call.1} parent=1 // pred_check_branch
      %54 = sbr.rel (0) target = $region21
    $region20: #{tpu_custom_call.1} parent=1 // pred_region
      _
    $region21: #{tpu_custom_call.1} parent=1 // pred_fallthru
      _
    // Predicated region
    $region22: #{tpu_custom_call.1} parent=1 // pred_check
      _
    $region23: #{tpu_custom_call.1} parent=1 // pred_check_branch
      %56 = sbr.rel (0) target = $region25
    $region24: #{tpu_custom_call.1} parent=1 // pred_region
      %s58 = ssub.s32 4096, 4096
      %59 = vsyncadd [#allocation9], %s58
      %s60 = sshll.u32 [#allocation8], 4
      %s61 = int_to_ptr.vmem [resolvable:$true] %s60
      %66 = dma.hbm_to_vmem [thread:$0]  %s5, 4096, %s61, [#allocation9], 128, 128, 8
    $region25: #{tpu_custom_call.1} parent=1 // pred_fallthru
      _
    // Predicated region
    $region26: #{tpu_custom_call.1} parent=1 // pred_check
      _
    $region27: #{tpu_custom_call.1} parent=1 // pred_check_branch
      %68 = sbr.rel (0) target = $region29
    $region28: #{tpu_custom_call.1} parent=1 // pred_region
      _
    $region29: #{tpu_custom_call.1} parent=1 // pred_fallthru
      _
    // Predicated region
    $region30: #{tpu_custom_call.1} parent=1 // pred_check
      _
    $region31: #{tpu_custom_call.1} parent=1 // pred_check_branch
      %70 = sbr.rel (0) target = $region33
    $region32: #{tpu_custom_call.1} parent=1 // pred_region
      _
    $region33: #{tpu_custom_call.1} parent=1 // pred_fallthru
      _
    // Predicated region
    $region34: #{tpu_custom_call.1} parent=1 // pred_check
      _
    $region35: #{tpu_custom_call.1} parent=1 // pred_check_branch
      %72 = sbr.rel (0) target = $region37
    $region36: #{tpu_custom_call.1} parent=1 // pred_region
      %73 = dma.done [#allocation3], 128
    $region37: #{tpu_custom_call.1} parent=1 // pred_fallthru
      _
    // Predicated region
    $region38: #{tpu_custom_call.1} parent=1 // pred_check
      _
    $region39: #{tpu_custom_call.1} parent=1 // pred_check_branch
      %75 = sbr.rel (0) target = $region41
    $region40: #{tpu_custom_call.1} parent=1 // pred_region
      %76 = dma.done [#allocation6], 1024
    $region41: #{tpu_custom_call.1} parent=1 // pred_fallthru
      _
    // Predicated region
    $region42: #{tpu_custom_call.1} parent=1 // pred_check
      _
    $region43: #{tpu_custom_call.1} parent=1 // pred_check_branch
      %78 = sbr.rel (0) target = $region45
    $region44: #{tpu_custom_call.1} parent=1 // pred_region
      %79 = dma.done [#allocation6], 8192
    $region45: #{tpu_custom_call.1} parent=1 // pred_fallthru
      _
    // Predicated region
    $region46: #{tpu_custom_call.1} parent=1 // pred_check
      _
    $region47: #{tpu_custom_call.1} parent=1 // pred_check_branch
      %81 = sbr.rel (0) target = $region49
    $region48: #{tpu_custom_call.1} parent=1 // pred_region
      %82 = dma.done [#allocation9], 4096
    $region49: #{tpu_custom_call.1} parent=1 // pred_fallthru
      _
    %v84 = vld [vmem:[#allocation2] sm:$0xff]
    %v85 = vpack.c.bf16 %v84, %v84
    %v86 = vld [vmem:[#allocation5] sm:$0xff]
    %v87 = vld [vmem:[#allocation5 + $0x8] sm:$0xff]
    %v88 = vld [vmem:[#allocation5 + $0x10] sm:$0xff]
    %v89 = vld [vmem:[#allocation5 + $0x18] sm:$0xff]
    %v90 = vld [vmem:[#allocation5 + $0x20] sm:$0xff]
    %v91 = vld [vmem:[#allocation5 + $0x28] sm:$0xff]
    %v92 = vld [vmem:[#allocation5 + $0x30] sm:$0xff]
    %v93 = vld [vmem:[#allocation5 + $0x38] sm:$0xff]
    %v94 = vld [vmem:[%s2] sm:$0xf]
    %v96 = vlaneseq
    %v97 = vshrl.u32 %v96, 7
    %v98 = vsub.s32 0, %v97
    %v99 = vrot.slane %v94, %v98
    %v100 = vlaneseq
    %v101 = vshrl.u32 %v100, 7
    %v102 = vsub.s32 1, %v101
    %v103 = vrot.slane %v94, %v102
    %v104 = vlaneseq
    %v105 = vshrl.u32 %v104, 7
    %v106 = vsub.s32 2, %v105
    %v107 = vrot.slane %v94, %v106
    %v108 = vlaneseq
    %v109 = vshrl.u32 %v108, 7
    %v110 = vsub.s32 3, %v109
    %v111 = vrot.slane %v94, %v110
    %v124 = vunpack.c.l.b16 %v86
    %v125 = vunpack.c.h.b16 %v86
    %v126 = vunpack.c.l.b16 %v87
    %v127 = vunpack.c.h.b16 %v87
    %v128 = vunpack.c.l.b16 %v88
    %v129 = vunpack.c.h.b16 %v88
    %v130 = vunpack.c.l.b16 %v89
    %v131 = vunpack.c.h.b16 %v89
    %v132 = vunpack.c.l.b16 %v90
    %v133 = vunpack.c.h.b16 %v90
    %v134 = vunpack.c.l.b16 %v91
    %v135 = vunpack.c.h.b16 %v91
    %v136 = vunpack.c.l.b16 %v92
    %v137 = vunpack.c.h.b16 %v92
    %v138 = vunpack.c.l.b16 %v93
    %v139 = vunpack.c.h.b16 %v93
    %v140 = vpack.c.b16 %v128, %v124
    %v141 = vpack.c.b16 %v129, %v125
    %v142 = vpack.c.b16 %v130, %v126
    %v143 = vpack.c.b16 %v131, %v127
    %v144 = vpack.c.b16 %v136, %v132
    %v145 = vpack.c.b16 %v137, %v133
    %v146 = vpack.c.b16 %v138, %v134
    %v147 = vpack.c.b16 %v139, %v135
    %vm156 = vcmask 261120
    %v158 = vsel %vm156, %v85, 0
    %160 = vmatprep.subr.bf16.mxu0 %v141
    %161 = vmatpush1.bf16.msra.mxu0 %v140
    %162 = vmatprep.subr.bf16.mxu0 %v145
    %163 = vmatpush1.bf16.msra.mxu0 %v144
    %164 = vmatprep.subr.bf16.mxu0 0
    %165 = vmatpush1.bf16.msra.mxu0 0
    %166 = vmatprep.subr.bf16.mxu0 0
    %167 = vmatpush1.bf16.msra.mxu0 0
    %168 = vmatprep.subr.bf16.mxu0 0
    %169 = vmatpush1.bf16.msra.mxu0 0
    %170 = vmatprep.subr.bf16.mxu0 0
    %171 = vmatpush1.bf16.msra.mxu0 0
    %172 = vmatprep.subr.bf16.mxu0 0
    %173 = vmatpush1.bf16.msra.mxu0 0
    %174 = vmatprep.subr.bf16.mxu0 0
    %175 = vmatpush1.bf16.msra.mxu0 0
    %176 = vmatprep.subr.bf16.mxu0 0
    %177 = vmatpush1.bf16.msra.mxu0 0
    %178 = vmatprep.subr.bf16.mxu0 0
    %179 = vmatpush1.bf16.msra.mxu0 0
    %180 = vmatprep.subr.bf16.mxu0 0
    %181 = vmatpush1.bf16.msra.mxu0 0
    %182 = vmatprep.subr.bf16.mxu0 0
    %183 = vmatpush1.bf16.msra.mxu0 0
    %184 = vmatprep.subr.bf16.mxu0 0
    %185 = vmatpush1.bf16.msra.mxu0 0
    %186 = vmatprep.subr.bf16.mxu0 0
    %187 = vmatpush1.bf16.msra.mxu0 0
    %188 = vmatprep.subr.bf16.mxu0 0
    %189 = vmatpush1.bf16.msra.mxu0 0
    %190 = vmatprep.subr.bf16.mxu0 0
    %191 = vmatpush1.bf16.msra.mxu0 0
    %192 = vmatprep.mubr.bf16.mxu0 0
    %193 = vmatmul.mubr.bf16.gmra.mrb[0].mxu0 %v158
    %v194 = vpop.f32.mrb[0].mxu0
    %v195 = vadd.f32 %v99, %v194
    %v196 = vpop.f32.mrb[0].mxu0
    %v197 = vadd.f32 %v103, %v196
    %v198 = vpop.f32.mrb[0].mxu0
    %v199 = vpop.f32.mrb[0].mxu0
    %200 = vdwg.mxu0
    %201 = vmatprep.subr.bf16.mxu0 %v143
    %202 = vmatpush1.bf16.msra.mxu0 %v142
    %203 = vmatprep.subr.bf16.mxu0 %v147
    %204 = vmatpush1.bf16.msra.mxu0 %v146
    %205 = vmatprep.subr.bf16.mxu0 0
    %206 = vmatpush1.bf16.msra.mxu0 0
    %207 = vmatprep.subr.bf16.mxu0 0
    %208 = vmatpush1.bf16.msra.mxu0 0
    %209 = vmatprep.subr.bf16.mxu0 0
    %210 = vmatpush1.bf16.msra.mxu0 0
    %211 = vmatprep.subr.bf16.mxu0 0
    %212 = vmatpush1.bf16.msra.mxu0 0
    %213 = vmatprep.subr.bf16.mxu0 0
    %214 = vmatpush1.bf16.msra.mxu0 0
    %215 = vmatprep.subr.bf16.mxu0 0
    %216 = vmatpush1.bf16.msra.mxu0 0
    %217 = vmatprep.subr.bf16.mxu0 0
    %218 = vmatpush1.bf16.msra.mxu0 0
    %219 = vmatprep.subr.bf16.mxu0 0
    %220 = vmatpush1.bf16.msra.mxu0 0
    %221 = vmatprep.subr.bf16.mxu0 0
    %222 = vmatpush1.bf16.msra.mxu0 0
    %223 = vmatprep.subr.bf16.mxu0 0
    %224 = vmatpush1.bf16.msra.mxu0 0
    %225 = vmatprep.subr.bf16.mxu0 0
    %226 = vmatpush1.bf16.msra.mxu0 0
    %227 = vmatprep.subr.bf16.mxu0 0
    %228 = vmatpush1.bf16.msra.mxu0 0
    %229 = vmatprep.subr.bf16.mxu0 0
    %230 = vmatpush1.bf16.msra.mxu0 0
    %231 = vmatprep.subr.bf16.mxu0 0
    %232 = vmatpush1.bf16.msra.mxu0 0
    %233 = vmatprep.mubr.bf16.mxu0 0
    %234 = vmatmul.mubr.bf16.gmra.mrb[0].mxu0 %v158
    %v235 = vpop.f32.mrb[0].mxu0
    %v236 = vadd.f32 %v107, %v235
    %v237 = vpop.f32.mrb[0].mxu0
    %v238 = vadd.f32 %v111, %v237
    %v239 = vpop.f32.mrb[0].mxu0
    %v240 = vpop.f32.mrb[0].mxu0
    %241 = vdwg.mxu0
    %v242 = vmax.f32 %v195, 0.0
    %v243 = vmax.f32 %v197, 0.0
    %v244 = vmax.f32 %v236, 0.0
    %v245 = vmax.f32 %v238, 0.0
    %v246 = vpack.c.bf16 %v242, %v242
    %v247 = vpack.c.bf16 %v243, %v243
    %v248 = vpack.c.bf16 %v244, %v244
    %v249 = vpack.c.bf16 %v245, %v245
    %v250 = vld [vmem:[#allocation7] sm:$0xff]
    %v251 = vld [vmem:[#allocation7 + $0x8] sm:$0xff]
    %v252 = vld [vmem:[#allocation7 + $0x10] sm:$0xff]
    %v253 = vld [vmem:[#allocation7 + $0x18] sm:$0xff]
    %v254 = vld [vmem:[#allocation7 + $0x20] sm:$0xff]
    %v255 = vld [vmem:[#allocation7 + $0x28] sm:$0xff]
    %v256 = vld [vmem:[#allocation7 + $0x30] sm:$0xff]
    %v257 = vld [vmem:[#allocation7 + $0x38] sm:$0xff]
    %v258 = vld [vmem:[#allocation7 + $0x40] sm:$0xff]
    %v259 = vld [vmem:[#allocation7 + $0x48] sm:$0xff]
    %v260 = vld [vmem:[#allocation7 + $0x50] sm:$0xff]
    %v261 = vld [vmem:[#allocation7 + $0x58] sm:$0xff]
    %v262 = vld [vmem:[#allocation7 + $0x60] sm:$0xff]
    %v263 = vld [vmem:[#allocation7 + $0x68] sm:$0xff]
    %v264 = vld [vmem:[#allocation7 + $0x70] sm:$0xff]
    %v265 = vld [vmem:[#allocation7 + $0x78] sm:$0xff]
    %v266 = vld [vmem:[#allocation7 + $0x80] sm:$0xff]
    %v267 = vld [vmem:[#allocation7 + $0x88] sm:$0xff]
    %v268 = vld [vmem:[#allocation7 + $0x90] sm:$0xff]
    %v269 = vld [vmem:[#allocation7 + $0x98] sm:$0xff]
    %v270 = vld [vmem:[#allocation7 + $0xa0] sm:$0xff]
    %v271 = vld [vmem:[#allocation7 + $0xa8] sm:$0xff]
    %v272 = vld [vmem:[#allocation7 + $0xb0] sm:$0xff]
    %v273 = vld [vmem:[#allocation7 + $0xb8] sm:$0xff]
    %v274 = vld [vmem:[#allocation7 + $0xc0] sm:$0xff]
    %v275 = vld [vmem:[#allocation7 + $0xc8] sm:$0xff]
    %v276 = vld [vmem:[#allocation7 + $0xd0] sm:$0xff]
    %v277 = vld [vmem:[#allocation7 + $0xd8] sm:$0xff]
    %v278 = vld [vmem:[#allocation7 + $0xe0] sm:$0xff]
    %v279 = vld [vmem:[#allocation7 + $0xe8] sm:$0xff]
    %v280 = vld [vmem:[#allocation7 + $0xf0] sm:$0xff]
    %v281 = vld [vmem:[#allocation7 + $0xf8] sm:$0xff]
    %v282 = vld [vmem:[#allocation7 + $0x100] sm:$0xff]
    %v283 = vld [vmem:[#allocation7 + $0x108] sm:$0xff]
    %v284 = vld [vmem:[#allocation7 + $0x110] sm:$0xff]
    %v285 = vld [vmem:[#allocation7 + $0x118] sm:$0xff]
    %v286 = vld [vmem:[#allocation7 + $0x120] sm:$0xff]
    %v287 = vld [vmem:[#allocation7 + $0x128] sm:$0xff]
    %v288 = vld [vmem:[#allocation7 + $0x130] sm:$0xff]
    %v289 = vld [vmem:[#allocation7 + $0x138] sm:$0xff]
    %v290 = vld [vmem:[#allocation7 + $0x140] sm:$0xff]
    %v291 = vld [vmem:[#allocation7 + $0x148] sm:$0xff]
    %v292 = vld [vmem:[#allocation7 + $0x150] sm:$0xff]
    %v293 = vld [vmem:[#allocation7 + $0x158] sm:$0xff]
    %v294 = vld [vmem:[#allocation7 + $0x160] sm:$0xff]
    %v295 = vld [vmem:[#allocation7 + $0x168] sm:$0xff]
    %v296 = vld [vmem:[#allocation7 + $0x170] sm:$0xff]
    %v297 = vld [vmem:[#allocation7 + $0x178] sm:$0xff]
    %v298 = vld [vmem:[#allocation7 + $0x180] sm:$0xff]
    %v299 = vld [vmem:[#allocation7 + $0x188] sm:$0xff]
    %v300 = vld [vmem:[#allocation7 + $0x190] sm:$0xff]
    %v301 = vld [vmem:[#allocation7 + $0x198] sm:$0xff]
    %v302 = vld [vmem:[#allocation7 + $0x1a0] sm:$0xff]
    %v303 = vld [vmem:[#allocation7 + $0x1a8] sm:$0xff]
    %v304 = vld [vmem:[#allocation7 + $0x1b0] sm:$0xff]
    %v305 = vld [vmem:[#allocation7 + $0x1b8] sm:$0xff]
    %v306 = vld [vmem:[#allocation7 + $0x1c0] sm:$0xff]
    %v307 = vld [vmem:[#allocation7 + $0x1c8] sm:$0xff]
    %v308 = vld [vmem:[#allocation7 + $0x1d0] sm:$0xff]
    %v309 = vld [vmem:[#allocation7 + $0x1d8] sm:$0xff]
    %v310 = vld [vmem:[#allocation7 + $0x1e0] sm:$0xff]
    %v311 = vld [vmem:[#allocation7 + $0x1e8] sm:$0xff]
    %v312 = vld [vmem:[#allocation7 + $0x1f0] sm:$0xff]
    %v313 = vld [vmem:[#allocation7 + $0x1f8] sm:$0xff]
    %v314 = vld [vmem:[%s4] sm:$0x3]
    %v316 = vlaneseq
    %v317 = vshrl.u32 %v316, 7
    %v318 = vsub.s32 0, %v317
    %v319 = vrot.slane %v314, %v318
    %v320 = vlaneseq
    %v321 = vshrl.u32 %v320, 7
    %v322 = vsub.s32 1, %v321
    %v323 = vrot.slane %v314, %v322
    %v390 = vunpack.c.l.b16 %v250
    %v391 = vunpack.c.h.b16 %v250
    %v392 = vunpack.c.l.b16 %v251
    %v393 = vunpack.c.h.b16 %v251
    %v394 = vunpack.c.l.b16 %v252
    %v395 = vunpack.c.h.b16 %v252
    %v396 = vunpack.c.l.b16 %v253
    %v397 = vunpack.c.h.b16 %v253
    %v398 = vunpack.c.l.b16 %v254
    %v399 = vunpack.c.h.b16 %v254
    %v400 = vunpack.c.l.b16 %v255
    %v401 = vunpack.c.h.b16 %v255
    %v402 = vunpack.c.l.b16 %v256
    %v403 = vunpack.c.h.b16 %v256
    %v404 = vunpack.c.l.b16 %v257
    %v405 = vunpack.c.h.b16 %v257
    %v406 = vunpack.c.l.b16 %v258
    %v407 = vunpack.c.h.b16 %v258
    %v408 = vunpack.c.l.b16 %v259
    %v409 = vunpack.c.h.b16 %v259
    %v410 = vunpack.c.l.b16 %v260
    %v411 = vunpack.c.h.b16 %v260
    %v412 = vunpack.c.l.b16 %v261
    %v413 = vunpack.c.h.b16 %v261
    %v414 = vunpack.c.l.b16 %v262
    %v415 = vunpack.c.h.b16 %v262
    %v416 = vunpack.c.l.b16 %v263
    %v417 = vunpack.c.h.b16 %v263
    %v418 = vunpack.c.l.b16 %v264
    %v419 = vunpack.c.h.b16 %v264
    %v420 = vunpack.c.l.b16 %v265
    %v421 = vunpack.c.h.b16 %v265
    %v422 = vunpack.c.l.b16 %v266
    %v423 = vunpack.c.h.b16 %v266
    %v424 = vunpack.c.l.b16 %v267
    %v425 = vunpack.c.h.b16 %v267
    %v426 = vunpack.c.l.b16 %v268
    %v427 = vunpack.c.h.b16 %v268
    %v428 = vunpack.c.l.b16 %v269
    %v429 = vunpack.c.h.b16 %v269
    %v430 = vunpack.c.l.b16 %v270
    %v431 = vunpack.c.h.b16 %v270
    %v432 = vunpack.c.l.b16 %v271
    %v433 = vunpack.c.h.b16 %v271
    %v434 = vunpack.c.l.b16 %v272
    %v435 = vunpack.c.h.b16 %v272
    %v436 = vunpack.c.l.b16 %v273
    %v437 = vunpack.c.h.b16 %v273
    %v438 = vunpack.c.l.b16 %v274
    %v439 = vunpack.c.h.b16 %v274
    %v440 = vunpack.c.l.b16 %v275
    %v441 = vunpack.c.h.b16 %v275
    %v442 = vunpack.c.l.b16 %v276
    %v443 = vunpack.c.h.b16 %v276
    %v444 = vunpack.c.l.b16 %v277
    %v445 = vunpack.c.h.b16 %v277
    %v446 = vunpack.c.l.b16 %v278
    %v447 = vunpack.c.h.b16 %v278
    %v448 = vunpack.c.l.b16 %v279
    %v449 = vunpack.c.h.b16 %v279
    %v450 = vunpack.c.l.b16 %v280
    %v451 = vunpack.c.h.b16 %v280
    %v452 = vunpack.c.l.b16 %v281
    %v453 = vunpack.c.h.b16 %v281
    %v454 = vunpack.c.l.b16 %v282
    %v455 = vunpack.c.h.b16 %v282
    %v456 = vunpack.c.l.b16 %v283
    %v457 = vunpack.c.h.b16 %v283
    %v458 = vunpack.c.l.b16 %v284
    %v459 = vunpack.c.h.b16 %v284
    %v460 = vunpack.c.l.b16 %v285
    %v461 = vunpack.c.h.b16 %v285
    %v462 = vunpack.c.l.b16 %v286
    %v463 = vunpack.c.h.b16 %v286
    %v464 = vunpack.c.l.b16 %v287
    %v465 = vunpack.c.h.b16 %v287
    %v466 = vunpack.c.l.b16 %v288
    %v467 = vunpack.c.h.b16 %v288
    %v468 = vunpack.c.l.b16 %v289
    %v469 = vunpack.c.h.b16 %v289
    %v470 = vunpack.c.l.b16 %v290
    %v471 = vunpack.c.h.b16 %v290
    %v472 = vunpack.c.l.b16 %v291
    %v473 = vunpack.c.h.b16 %v291
    %v474 = vunpack.c.l.b16 %v292
    %v475 = vunpack.c.h.b16 %v292
    %v476 = vunpack.c.l.b16 %v293
    %v477 = vunpack.c.h.b16 %v293
    %v478 = vunpack.c.l.b16 %v294
    %v479 = vunpack.c.h.b16 %v294
    %v480 = vunpack.c.l.b16 %v295
    %v481 = vunpack.c.h.b16 %v295
    %v482 = vunpack.c.l.b16 %v296
    %v483 = vunpack.c.h.b16 %v296
    %v484 = vunpack.c.l.b16 %v297
    %v485 = vunpack.c.h.b16 %v297
    %v486 = vunpack.c.l.b16 %v298
    %v487 = vunpack.c.h.b16 %v298
    %v488 = vunpack.c.l.b16 %v299
    %v489 = vunpack.c.h.b16 %v299
    %v490 = vunpack.c.l.b16 %v300
    %v491 = vunpack.c.h.b16 %v300
    %v492 = vunpack.c.l.b16 %v301
    %v493 = vunpack.c.h.b16 %v301
    %v494 = vunpack.c.l.b16 %v302
    %v495 = vunpack.c.h.b16 %v302
    %v496 = vunpack.c.l.b16 %v303
    %v497 = vunpack.c.h.b16 %v303
    %v498 = vunpack.c.l.b16 %v304
    %v499 = vunpack.c.h.b16 %v304
    %v500 = vunpack.c.l.b16 %v305
    %v501 = vunpack.c.h.b16 %v305
    %v502 = vunpack.c.l.b16 %v306
    %v503 = vunpack.c.h.b16 %v306
    %v504 = vunpack.c.l.b16 %v307
    %v505 = vunpack.c.h.b16 %v307
    %v506 = vunpack.c.l.b16 %v308
    %v507 = vunpack.c.h.b16 %v308
    %v508 = vunpack.c.l.b16 %v309
    %v509 = vunpack.c.h.b16 %v309
    %v510 = vunpack.c.l.b16 %v310
    %v511 = vunpack.c.h.b16 %v310
    %v512 = vunpack.c.l.b16 %v311
    %v513 = vunpack.c.h.b16 %v311
    %v514 = vunpack.c.l.b16 %v312
    %v515 = vunpack.c.h.b16 %v312
    %v516 = vunpack.c.l.b16 %v313
    %v517 = vunpack.c.h.b16 %v313
    %v518 = vpack.c.b16 %v392, %v390
    %v519 = vpack.c.b16 %v393, %v391
    %v520 = vpack.c.b16 %v396, %v394
    %v521 = vpack.c.b16 %v397, %v395
    %v522 = vpack.c.b16 %v400, %v398
    %v523 = vpack.c.b16 %v401, %v399
    %v524 = vpack.c.b16 %v404, %v402
    %v525 = vpack.c.b16 %v405, %v403
    %v526 = vpack.c.b16 %v408, %v406
    %v527 = vpack.c.b16 %v409, %v407
    %v528 = vpack.c.b16 %v412, %v410
    %v529 = vpack.c.b16 %v413, %v411
    %v530 = vpack.c.b16 %v416, %v414
    %v531 = vpack.c.b16 %v417, %v415
    %v532 = vpack.c.b16 %v420, %v418
    %v533 = vpack.c.b16 %v421, %v419
    %v534 = vpack.c.b16 %v424, %v422
    %v535 = vpack.c.b16 %v425, %v423
    %v536 = vpack.c.b16 %v428, %v426
    %v537 = vpack.c.b16 %v429, %v427
    %v538 = vpack.c.b16 %v432, %v430
    %v539 = vpack.c.b16 %v433, %v431
    %v540 = vpack.c.b16 %v436, %v434
    %v541 = vpack.c.b16 %v437, %v435
    %v542 = vpack.c.b16 %v440, %v438
    %v543 = vpack.c.b16 %v441, %v439
    %v544 = vpack.c.b16 %v444, %v442
    %v545 = vpack.c.b16 %v445, %v443
    %v546 = vpack.c.b16 %v448, %v446
    %v547 = vpack.c.b16 %v449, %v447
    %v548 = vpack.c.b16 %v452, %v450
    %v549 = vpack.c.b16 %v453, %v451
    %v550 = vpack.c.b16 %v456, %v454
    %v551 = vpack.c.b16 %v457, %v455
    %v552 = vpack.c.b16 %v460, %v458
    %v553 = vpack.c.b16 %v461, %v459
    %v554 = vpack.c.b16 %v464, %v462
    %v555 = vpack.c.b16 %v465, %v463
    %v556 = vpack.c.b16 %v468, %v466
    %v557 = vpack.c.b16 %v469, %v467
    %v558 = vpack.c.b16 %v472, %v470
    %v559 = vpack.c.b16 %v473, %v471
    %v560 = vpack.c.b16 %v476, %v474
    %v561 = vpack.c.b16 %v477, %v475
    %v562 = vpack.c.b16 %v480, %v478
    %v563 = vpack.c.b16 %v481, %v479
    %v564 = vpack.c.b16 %v484, %v482
    %v565 = vpack.c.b16 %v485, %v483
    %v566 = vpack.c.b16 %v488, %v486
    %v567 = vpack.c.b16 %v489, %v487
    %v568 = vpack.c.b16 %v492, %v490
    %v569 = vpack.c.b16 %v493, %v491
    %v570 = vpack.c.b16 %v496, %v494
    %v571 = vpack.c.b16 %v497, %v495
    %v572 = vpack.c.b16 %v500, %v498
    %v573 = vpack.c.b16 %v501, %v499
    %v574 = vpack.c.b16 %v504, %v502
    %v575 = vpack.c.b16 %v505, %v503
    %v576 = vpack.c.b16 %v508, %v506
    %v577 = vpack.c.b16 %v509, %v507
    %v578 = vpack.c.b16 %v512, %v510
    %v579 = vpack.c.b16 %v513, %v511
    %v580 = vpack.c.b16 %v516, %v514
    %v581 = vpack.c.b16 %v517, %v515
    %646 = vmatprep.subr.bf16.mxu0 %v519
    %647 = vmatpush1.bf16.msra.mxu0 %v518
    %648 = vmatprep.subr.bf16.mxu0 %v521
    %649 = vmatpush1.bf16.msra.mxu0 %v520
    %650 = vmatprep.subr.bf16.mxu0 %v523
    %651 = vmatpush1.bf16.msra.mxu0 %v522
    %652 = vmatprep.subr.bf16.mxu0 %v525
    %653 = vmatpush1.bf16.msra.mxu0 %v524
    %654 = vmatprep.subr.bf16.mxu0 %v527
    %655 = vmatpush1.bf16.msra.mxu0 %v526
    %656 = vmatprep.subr.bf16.mxu0 %v529
    %657 = vmatpush1.bf16.msra.mxu0 %v528
    %658 = vmatprep.subr.bf16.mxu0 %v531
    %659 = vmatpush1.bf16.msra.mxu0 %v530
    %660 = vmatprep.subr.bf16.mxu0 %v533
    %661 = vmatpush1.bf16.msra.mxu0 %v532
    %662 = vmatprep.subr.bf16.mxu0 %v535
    %663 = vmatpush1.bf16.msra.mxu0 %v534
    %664 = vmatprep.subr.bf16.mxu0 %v537
    %665 = vmatpush1.bf16.msra.mxu0 %v536
    %666 = vmatprep.subr.bf16.mxu0 %v539
    %667 = vmatpush1.bf16.msra.mxu0 %v538
    %668 = vmatprep.subr.bf16.mxu0 %v541
    %669 = vmatpush1.bf16.msra.mxu0 %v540
    %670 = vmatprep.subr.bf16.mxu0 %v543
    %671 = vmatpush1.bf16.msra.mxu0 %v542
    %672 = vmatprep.subr.bf16.mxu0 %v545
    %673 = vmatpush1.bf16.msra.mxu0 %v544
    %674 = vmatprep.subr.bf16.mxu0 %v547
    %675 = vmatpush1.bf16.msra.mxu0 %v546
    %676 = vmatprep.subr.bf16.mxu0 %v549
    %677 = vmatpush1.bf16.msra.mxu0 %v548
    %678 = vmatprep.mubr.bf16.mxu0 %v247
    %679 = vmatmul.mubr.bf16.gmra.mrb[0].mxu0 %v246
    %v680 = vpop.f32.mrb[0].mxu0
    %v681 = vadd.f32 %v319, %v680
    %v682 = vpop.f32.mrb[0].mxu0
    %v683 = vadd.f32 %v323, %v682
    %v684 = vpop.f32.mrb[0].mxu0
    %v685 = vpop.f32.mrb[0].mxu0
    %686 = vdwg.mxu0
    %687 = vmatprep.subr.bf16.mxu0 %v551
    %688 = vmatpush1.bf16.msra.mxu0 %v550
    %689 = vmatprep.subr.bf16.mxu0 %v553
    %690 = vmatpush1.bf16.msra.mxu0 %v552
    %691 = vmatprep.subr.bf16.mxu0 %v555
    %692 = vmatpush1.bf16.msra.mxu0 %v554
    %693 = vmatprep.subr.bf16.mxu0 %v557
    %694 = vmatpush1.bf16.msra.mxu0 %v556
    %695 = vmatprep.subr.bf16.mxu0 %v559
    %696 = vmatpush1.bf16.msra.mxu0 %v558
    %697 = vmatprep.subr.bf16.mxu0 %v561
    %698 = vmatpush1.bf16.msra.mxu0 %v560
    %699 = vmatprep.subr.bf16.mxu0 %v563
    %700 = vmatpush1.bf16.msra.mxu0 %v562
    %701 = vmatprep.subr.bf16.mxu0 %v565
    %702 = vmatpush1.bf16.msra.mxu0 %v564
    %703 = vmatprep.subr.bf16.mxu0 %v567
    %704 = vmatpush1.bf16.msra.mxu0 %v566
    %705 = vmatprep.subr.bf16.mxu0 %v569
    %706 = vmatpush1.bf16.msra.mxu0 %v568
    %707 = vmatprep.subr.bf16.mxu0 %v571
    %708 = vmatpush1.bf16.msra.mxu0 %v570
    %709 = vmatprep.subr.bf16.mxu0 %v573
    %710 = vmatpush1.bf16.msra.mxu0 %v572
    %711 = vmatprep.subr.bf16.mxu0 %v575
    %712 = vmatpush1.bf16.msra.mxu0 %v574
    %713 = vmatprep.subr.bf16.mxu0 %v577
    %714 = vmatpush1.bf16.msra.mxu0 %v576
    %715 = vmatprep.subr.bf16.mxu0 %v579
    %716 = vmatpush1.bf16.msra.mxu0 %v578
    %717 = vmatprep.subr.bf16.mxu0 %v581
    %718 = vmatpush1.bf16.msra.mxu0 %v580
    %719 = vmatprep.mubr.bf16.mxu0 %v249
    %720 = vmatmul.mubr.bf16.gmra.mrb[0].mxu0 %v248
    %v721 = vpop.f32.mrb[0].mxu0
    %v722 = vadd.f32 %v681, %v721
    %v723 = vpop.f32.mrb[0].mxu0
    %v724 = vadd.f32 %v683, %v723
    %v725 = vpop.f32.mrb[0].mxu0
    %v726 = vpop.f32.mrb[0].mxu0
    %727 = vdwg.mxu0
    %v728 = vmax.f32 %v722, 0.0
    %v729 = vmax.f32 %v724, 0.0
    %v730 = vld [vmem:[#allocation8] sm:$0xff]
    %v731 = vld [vmem:[#allocation8 + $0x8] sm:$0xff]
    %v732 = vld [vmem:[#allocation8 + $0x10] sm:$0xff]
    %v733 = vld [vmem:[#allocation8 + $0x18] sm:$0xff]
    %v734 = vld [vmem:[#allocation8 + $0x20] sm:$0xff]
    %v735 = vld [vmem:[#allocation8 + $0x28] sm:$0xff]
    %v736 = vld [vmem:[#allocation8 + $0x30] sm:$0xff]
    %v737 = vld [vmem:[#allocation8 + $0x38] sm:$0xff]
    %v738 = vld [vmem:[#allocation8 + $0x40] sm:$0xff]
    %v739 = vld [vmem:[#allocation8 + $0x48] sm:$0xff]
    %v740 = vld [vmem:[#allocation8 + $0x50] sm:$0xff]
    %v741 = vld [vmem:[#allocation8 + $0x58] sm:$0xff]
    %v742 = vld [vmem:[#allocation8 + $0x60] sm:$0xff]
    %v743 = vld [vmem:[#allocation8 + $0x68] sm:$0xff]
    %v744 = vld [vmem:[#allocation8 + $0x70] sm:$0xff]
    %v745 = vld [vmem:[#allocation8 + $0x78] sm:$0xff]
    %v746 = vld [vmem:[#allocation8 + $0x80] sm:$0xff]
    %v747 = vld [vmem:[#allocation8 + $0x88] sm:$0xff]
    %v748 = vld [vmem:[#allocation8 + $0x90] sm:$0xff]
    %v749 = vld [vmem:[#allocation8 + $0x98] sm:$0xff]
    %v750 = vld [vmem:[#allocation8 + $0xa0] sm:$0xff]
    %v751 = vld [vmem:[#allocation8 + $0xa8] sm:$0xff]
    %v752 = vld [vmem:[#allocation8 + $0xb0] sm:$0xff]
    %v753 = vld [vmem:[#allocation8 + $0xb8] sm:$0xff]
    %v754 = vld [vmem:[#allocation8 + $0xc0] sm:$0xff]
    %v755 = vld [vmem:[#allocation8 + $0xc8] sm:$0xff]
    %v756 = vld [vmem:[#allocation8 + $0xd0] sm:$0xff]
    %v757 = vld [vmem:[#allocation8 + $0xd8] sm:$0xff]
    %v758 = vld [vmem:[#allocation8 + $0xe0] sm:$0xff]
    %v759 = vld [vmem:[#allocation8 + $0xe8] sm:$0xff]
    %v760 = vld [vmem:[#allocation8 + $0xf0] sm:$0xff]
    %v761 = vld [vmem:[#allocation8 + $0xf8] sm:$0xff]
    %v762 = vld [vmem:[%s6] sm:$0x1]
    %v764 = vlaneseq
    %v765 = vshrl.u32 %v764, 7
    %v766 = vsub.s32 0, %v765
    %v767 = vrot.slane %v762, %v766
    %769 = vmatprep.subr.mxu0 0.0
    %770 = vmatpush1.msra.mxu0 %v730
    %771 = vmatprep.subr.mxu0 0.0
    %772 = vmatpush1.msra.mxu0 %v731
    %773 = vmatprep.subr.mxu0 0.0
    %774 = vmatpush1.msra.mxu0 %v732
    %775 = vmatprep.subr.mxu0 0.0
    %776 = vmatpush1.msra.mxu0 %v733
    %777 = vmatprep.subr.mxu0 0.0
    %778 = vmatpush1.msra.mxu0 %v734
    %779 = vmatprep.subr.mxu0 0.0
    %780 = vmatpush1.msra.mxu0 %v735
    %781 = vmatprep.subr.mxu0 0.0
    %782 = vmatpush1.msra.mxu0 %v736
    %783 = vmatprep.subr.mxu0 0.0
    %784 = vmatpush1.msra.mxu0 %v737
    %785 = vmatprep.subr.mxu0 0.0
    %786 = vmatpush1.msra.mxu0 %v738
    %787 = vmatprep.subr.mxu0 0.0
    %788 = vmatpush1.msra.mxu0 %v739
    %789 = vmatprep.subr.mxu0 0.0
    %790 = vmatpush1.msra.mxu0 %v740
    %791 = vmatprep.subr.mxu0 0.0
    %792 = vmatpush1.msra.mxu0 %v741
    %793 = vmatprep.subr.mxu0 0.0
    %794 = vmatpush1.msra.mxu0 %v742
    %795 = vmatprep.subr.mxu0 0.0
    %796 = vmatpush1.msra.mxu0 %v743
    %797 = vmatprep.subr.mxu0 0.0
    %798 = vmatpush1.msra.mxu0 %v744
    %799 = vmatprep.subr.mxu0 0.0
    %800 = vmatpush1.msra.mxu0 %v745
    %801 = vmatprep.subr.mxu0 0.0
    %802 = vmatpush1.msra.mxu0 %v746
    %803 = vmatprep.subr.mxu0 0.0
    %804 = vmatpush1.msra.mxu0 %v747
    %805 = vmatprep.subr.mxu0 0.0
    %806 = vmatpush1.msra.mxu0 %v748
    %807 = vmatprep.subr.mxu0 0.0
    %808 = vmatpush1.msra.mxu0 %v749
    %809 = vmatprep.subr.mxu0 0.0
    %810 = vmatpush1.msra.mxu0 %v750
    %811 = vmatprep.subr.mxu0 0.0
    %812 = vmatpush1.msra.mxu0 %v751
    %813 = vmatprep.subr.mxu0 0.0
    %814 = vmatpush1.msra.mxu0 %v752
    %815 = vmatprep.subr.mxu0 0.0
    %816 = vmatpush1.msra.mxu0 %v753
    %817 = vmatprep.subr.mxu0 0.0
    %818 = vmatpush1.msra.mxu0 %v754
    %819 = vmatprep.subr.mxu0 0.0
    %820 = vmatpush1.msra.mxu0 %v755
    %821 = vmatprep.subr.mxu0 0.0
    %822 = vmatpush1.msra.mxu0 %v756
    %823 = vmatprep.subr.mxu0 0.0
    %824 = vmatpush1.msra.mxu0 %v757
    %825 = vmatprep.subr.mxu0 0.0
    %826 = vmatpush1.msra.mxu0 %v758
    %827 = vmatprep.subr.mxu0 0.0
    %828 = vmatpush1.msra.mxu0 %v759
    %829 = vmatprep.subr.mxu0 0.0
    %830 = vmatpush1.msra.mxu0 %v760
    %831 = vmatprep.subr.mxu0 0.0
    %832 = vmatpush1.msra.mxu0 %v761
    %833 = vmatprep.mubr.f32.mxu0 %v729
    %834 = vmatmul.mubr.f32.gmra.mrb[0].mxu0 %v728
    %v835 = vpop.f32.mrb[0].mxu0
    %v836 = vadd.f32 %v767, %v835
    %v837 = vpop.f32.mrb[0].mxu0
    %838 = vdwg.mxu0
    %v839 = vtanh.pop %v836
    %vm840 = vcmp.gt.f32.partialorder %v836, 20.0
    %v841 = vmin.f32 %v836, 20.0
    %v842 = vmul.f32 %v841, 1.442695
    %v843 = vpow.pop %v842
    %v844 = vadd.f32 %v843, 1.0
    %v845 = vlog2.pop %v844
    %v846 = vmul.f32 %v845, 0.6931472
    %v847 = vmul.f32 -0.5, %v843
    %v848 = vadd.f32 %v847, 1.0
    %v849 = vmul.f32 %v848, %v843
    %v850 = vand.u32 2147483647, %v843
    %vm851 = vcmp.lt.f32.partialorder %v850, 0.0004427343
    %v852 = vsel %vm851, %v849, %v846
    %v853 = vsel %vm840, %v836, %v852
    %v854 = vlog2.pop %v853
    %v855 = vmul.f32 %v854, 0.6931472
    %v856 = vld [vmem:[%s7] sm:$0xff]
    %858 = vrot.lane.b32.xlu0 %v856, 8
    %v859 = vpop.permute.xlu0 %858
    %v861 = vmul.f32 %v853, %v859
    %863 = vrot.lane.b32.xlu0 %v861, 120
    %v864 = vpop.permute.xlu0 %863
    %v866 = vadd.f32 %v839, %v864
    %v867 = vmul.f32 %v856, -0.5
    %v868 = vmul.f32 %v867, %v856
    %870 = vrot.lane.b32.xlu0 %v855, 120
    %v871 = vpop.permute.xlu0 %870
    %v873 = vsub.f32 %v868, %v871
    %v874 = vsub.f32 %v873, 0.9189385
    %v875 = vadd.f32 %v855, 1.4189385
    %877 = vrot.lane.b32.xlu0 %v874, 8
    %v878 = vpop.permute.xlu0 %877
    %881 = vrot.lane.b32.xlu0 %v875, 8
    %v882 = vpop.permute.xlu0 %881
    %885 = vrot.lane.b32.xlu0 %v836, 8
    %v886 = vpop.permute.xlu0 %885
    %vm888 = vcmask 64512
    %v889 = vsel %vm888, %v866, %v878
    %vm890 = vcmask 130048
    %v891 = vsel %vm890, %v889, %v882
    %vm892 = vcmask 195584
    %v893 = vsel %vm892, %v891, %v886
    %vm894 = vcmask 203776
    %v895 = vsel %vm894, %v893, 0.0
    %896 = vst [vmem:[#allocation10] sm:$0xff] %v895
    // Predicated region
    $region50: #{tpu_custom_call.1} parent=1 // pred_check
      _
    $region51: #{tpu_custom_call.1} parent=1 // pred_check_branch
      %898 = sbr.rel (0) target = $region53
    $region52: #{tpu_custom_call.1} parent=1 // pred_region
      %s900 = ssub.s32 128, 128
      %901 = vsyncadd [#allocation4], %s900
      %s903 = sshll.u32 [#allocation10], 4
      %s904 = int_to_ptr.vmem [resolvable:$true] %s903
      %906 = dma.vmem_to_hbm [thread:$0]  %s904, 128, %s8, [#allocation4]
    $region53: #{tpu_custom_call.1} parent=1 // pred_fallthru
      _
    // Predicated region
    $region54: #{tpu_custom_call.1} parent=1 // pred_check
      _
    $region55: #{tpu_custom_call.1} parent=1 // pred_check_branch
      %908 = sbr.rel (0) target = $region57
    $region56: #{tpu_custom_call.1} parent=1 // pred_region
      %909 = dma.done [#allocation4], 128
    $region57: #{tpu_custom_call.1} parent=1 // pred_fallthru
      _
    %910 = vsyncpa [#allocation3], 1
    %911 = vsyncpa [#allocation6], 1
    %912 = vsyncpa [#allocation9], 1
    %913 = vsyncpa [#allocation4], 1

</llo_original>
